<compile_context>
chip_gen: v6e
topology: v6e:2x2x1
jax: 0.10.0
libtpu: 0.0.40
codegen_flags: <defaults>
</compile_context>

<pallas_src>
import numpy as np
import jax
import jax.numpy as jnp
from jax.experimental import pallas as pl
from jax.experimental.pallas import tpu as pltpu

N_FEAT, N_HID, OUT_FEATURES, N_HEADS = 9, 14, 8, 2
OUT_HID = 8        # hidden width of the self.out MLP (nn.Linear(2*n_hid, 8))
ALPHA_HEAD = 0.2   # GraphAttentionLayer default LeakyReLU slope
ALPHA_OUT = 0.01   # nn.LeakyReLU() default slope inside self.out
WIDTH = 128        # lane-dense output / MLP slab width


def gat_kernel(x_ref, sel_ref, wa_ref, wout_ref, out_ref):
    """One batch element per grid step; both heads fused.

    x_ref    : [1, N, F]          this batch element's node features
    sel_ref  : [N+2, N]           rows 0:N   = M^T   (masked neighbour sums, node-0 folded in)
                                  row  N     = node-sum row (node 0 excluded)
                                  row  N+1   = connect selection  mask0/cnt (node 0 excluded)
    wa_ref   : [FP+2N+2NH, 2NH]   [W1|W2] (row-padded) ; A_self ; A_neigh ; per-head ones block
    wout_ref : [2NH+2+WIDTH, WIDTH]  Wl1 ; bl1 ; Wl2 (row/col padded) ; bl2  (zero-padded cols)
    out_ref  : [1, 1, WIDTH]      lane-dense output tile (cols >= OUT_FEATURES are zero)
    """
    N = sel_ref.shape[1]
    F = x_ref.shape[-1]
    NH2 = wa_ref.shape[1]
    FP = wa_ref.shape[0] - 2 * N - NH2
    W = out_ref.shape[-1]

    x = x_ref[0]                                  # [N, F]
    wa = wa_ref[...]
    W12 = wa[:F, :]                               # [F, 2NH]
    A_self = wa[FP:FP + N, :]                     # [N, 2NH]
    A_neigh = wa[FP + N:FP + 2 * N, :]            # [N, 2NH]
    Bsel = wa[FP + 2 * N:, :]                     # [2NH, 2NH] per-head block of ones
    sel = sel_ref[...]                            # [N+2, N]

    # (1) fused head projections (both heads in one matmul).
    H = jnp.dot(x, W12, preferred_element_type=jnp.float32)                   # [N, 2NH]

    # (2) masked neighbour sums S (rows 0..N-1) + node sum hsum (row N) in one matmul.
    SB = jnp.dot(sel[:N + 1, :], H, preferred_element_type=jnp.float32)       # [N+1, 2NH]
    S = SB[:N, :]
    hsum = SB[N:N + 1, :]                                                      # [1, 2NH]

    # (3) per-node attention scalar per head; head-split reduction done on the MXU.
    Psc = H * A_self + S * A_neigh                                             # [N, 2NH]
    scal = jnp.dot(Psc, Bsel, preferred_element_type=jnp.float32)              # [N, 2NH]
    hp = scal * hsum                                                           # == attention @ h
    O = jnp.where(hp >= 0, hp, ALPHA_HEAD * hp)                                # heads concat'd
    # NOTE: row 0 of O is not forced to 0 in-kernel; the reference's h'[:,0,:]==0 is
    # reproduced by csel row (sel[N+1]) having a 0 weight at node 0.

    # (4) mean over connected nodes + output MLP, all in the padded 128-lane width.
    # TODO(synk): F.dropout / nn.Dropout are stochastic; implemented as identity (eval mode).
    C = jnp.dot(sel[N + 1:N + 2, :], O, preferred_element_type=jnp.float32)    # [1, 2NH]
    wout = wout_ref[...]
    Z = jnp.dot(C, wout[:NH2, :], preferred_element_type=jnp.float32) \
        + wout[NH2:NH2 + 1, :]                                                 # [1, W]
    Z = jnp.where(Z >= 0, Z, ALPHA_OUT * Z)                                    # LeakyReLU(0.01)
    Y = jnp.dot(Z, wout[NH2 + 1:NH2 + 1 + W, :], preferred_element_type=jnp.float32) \
        + wout[NH2 + 1 + W:NH2 + 2 + W, :]                                     # [1, W]
    out_ref[...] = Y.reshape(out_ref.shape)                                    # lane-dense store


def prepare_gat_operands(params, adj):
    """One-time preprocessing (pure function of params/adj); keep OUT of the hot path."""
    f32 = jnp.float32
    adj = adj.astype(f32)
    N = adj.shape[0]
    NH = N_HID
    NH2 = 2 * NH

    # --- adj-derived selection slab [N+2, N] ---
    # M[j, i] = 1 iff adj[j+1, i] > 0 (j = 0..N-2); row N-1 = 0; row 0 zeroed (h[:,0,:]=0).
    M = jnp.concatenate([(adj[1:, :] > 0).astype(f32), jnp.zeros((1, N), f32)], axis=0)
    M = M.at[0, :].set(0.0)
    nodesum_row = jnp.ones((1, N), f32).at[0, 0].set(0.0)       # node sum skips zeroed node 0
    mask0 = (adj[:, 0] != 0).astype(f32)
    # NOTE: reference divides by len(index) and would raise on an empty connect set;
    # we guard with max(.,1) intentionally (documented divergence).
    cnt = jnp.maximum(jnp.sum(mask0), 1.0)
    csel_row = (mask0 / cnt).at[0].set(0.0)[None, :]             # node-0 head output is exactly 0
    sel = jnp.concatenate([M.T, nodesum_row, csel_row], axis=0)  # [N+2, N]

    # --- projection / attention parameter slab [FP+2N+2NH, 2NH] ---
    FP = ((N_FEAT + 7) // 8) * 8
    W12 = jnp.concatenate([params["W1"], params["W2"]], axis=1)             # [F, 2NH]
    W12p = jnp.pad(W12, ((0, FP - N_FEAT), (0, 0)))
    a1, a2 = params["a1"], params["a2"]                                     # [2NH, N] each
    A_self = jnp.concatenate([a1[:NH, :].T, a2[:NH, :].T], axis=1)          # [N, 2NH]
    A_neigh = jnp.concatenate([a1[NH:, :].T, a2[NH:, :].T], axis=1)         # [N, 2NH]
    head_id = (jnp.arange(NH2) >= NH).astype(f32)
    Bsel = (head_id[:, None] == head_id[None, :]).astype(f32)               # [2NH, 2NH]
    wa = jnp.concatenate([W12p, A_self, A_neigh, Bsel], axis=0)             # [FP+2N+2NH, 2NH]

    # --- output-MLP slab, padded to 128 lanes so the kernel's tail is lane-dense ---
    def padc(m):
        return jnp.pad(m, ((0, 0), (0, WIDTH - m.shape[1])))
    Wl1p = padc(params["Wl1"])                                              # [2NH, 128]
    bl1p = padc(params["bl1"][None, :])                                     # [1, 128]
    Wl2p = jnp.pad(params["Wl2"],
                   ((0, WIDTH - OUT_HID), (0, WIDTH - OUT_FEATURES)))       # [128, 128]
    bl2p = padc(params["bl2"][None, :])                                     # [1, 128]
    wout = jnp.concatenate([Wl1p, bl1p, Wl2p, bl2p], axis=0)                # [2NH+2+128, 128]

    return (jax.device_put(sel), jax.device_put(wa), jax.device_put(wout))


@jax.jit
def gat_forward(x, sel, wa, wout):
    """x: [B, N, n_feat] + prebuilt slabs -> [B, out_features]."""
    x = x.astype(jnp.float32)
    B, N, F = x.shape

    out = pl.pallas_call(
        gat_kernel,
        out_shape=jax.ShapeDtypeStruct((B, 1, WIDTH), jnp.float32),
        grid=(B,),
        in_specs=[
            pl.BlockSpec((1, N, F), lambda b: (b, 0, 0)),          # per-batch node features
            pl.BlockSpec(tuple(sel.shape), lambda b: (0, 0)),      # batch-invariant, fetched once
            pl.BlockSpec(tuple(wa.shape), lambda b: (0, 0)),
            pl.BlockSpec(tuple(wout.shape), lambda b: (0, 0)),
        ],
        out_specs=pl.BlockSpec((1, 1, WIDTH), lambda b: (b, 0, 0)),
        compiler_params=pltpu.CompilerParams(
            dimension_semantics=("parallel",)),                    # shard batch over v7x's 2 TCs
    )(x, sel, wa, wout)

    return out.reshape(B, WIDTH)[:, :OUT_FEATURES]


def init_params(key, num_nodes):
    ks = jax.random.split(key, 8)

    def xavier(k, shape, gain=1.414):
        bound = gain * np.sqrt(6.0 / (shape[0] + shape[1]))
        return jax.random.uniform(k, shape, jnp.float32, -bound, bound)

    return dict(
        W1=xavier(ks[0], (N_FEAT, N_HID)),
        W2=xavier(ks[1], (N_FEAT, N_HID)),
        a1=xavier(ks[2], (2 * N_HID, num_nodes)),   # self.a (re-created per forward in torch)
        a2=xavier(ks[3], (2 * N_HID, num_nodes)),
        Wl1=xavier(ks[4], (N_HEADS * N_HID, OUT_HID), gain=1.0),
        bl1=jax.random.uniform(ks[5], (OUT_HID,), jnp.float32, -0.1, 0.1),
        Wl2=xavier(ks[6], (OUT_HID, OUT_FEATURES), gain=1.0),
        bl2=jax.random.uniform(ks[7], (OUT_FEATURES,), jnp.float32, -0.1, 0.1),
    )


def reference_forward(x, adj, params):
    """NumPy port of the PyTorch forward (dropout = identity)."""
    x = np.asarray(x, np.float32)
    adj = np.asarray(adj, np.float32)
    p = {k: np.asarray(v, np.float32) for k, v in params.items()}
    B, N, _ = x.shape

    def layer(W, a):
        h = x @ W
        h[:, 0, :] = 0.0
        attention = np.zeros((B, N, N), np.float32)
        for i in range(1, N):
            ac = a[:, i]
            index = np.where(adj[1:, i] > 0)[0]
            if index.size == 0:
                val = h[:, i, :] @ ac[:N_HID]
            else:
                h1 = h[:, i, :]
                h2 = h[:, index, :].sum(axis=1)
                val = np.concatenate([h1, h2], axis=1) @ ac
            attention[:, i, :] = val[:, None]
        h_prime = attention @ h
        return np.where(h_prime >= 0, h_prime, 0.2 * h_prime)

    xx = np.concatenate([layer(p["W1"], p["a1"]), layer(p["W2"], p["a2"])], axis=-1)
    index = np.where(adj[:, 0])[0]
    connect = xx[:, index, :].sum(axis=1) / len(index)
    z = connect @ p["Wl1"] + p["bl1"]
    z = np.where(z >= 0, z, 0.01 * z)
    return z @ p["Wl2"] + p["bl2"]


if __name__ == "__main__":
    key = jax.random.PRNGKey(0)
    kx, ka, kp = jax.random.split(key, 3)

    B, N = 2, 8
    x = jax.random.normal(kx, (B, N, N_FEAT), jnp.float32)
    adj = (jax.random.uniform(ka, (N, N)) > 0.5).astype(jnp.float32)
    adj = adj.at[0, 0].set(1.0)   # guarantee len(where(adj[:, 0])) > 0

    params = init_params(kp, N)

    # One-time preprocessing (outside the hot path); reuse across many forward calls.
    sel, wa, wout = prepare_gat_operands(params, adj)

    out = gat_forward(x, sel, wa, wout)
    out = jax.block_until_ready(out)

    ref = reference_forward(x, adj, params)
    np.testing.assert_allclose(np.asarray(out), ref, rtol=5e-3, atol=5e-3)

    print("KERNEL_OK")
</pallas_src>

<mosaic_0001>
module attributes {stable_mosaic.version = 11 : i64} {
  func.func @gat_kernel(%arg0: i32, %arg1: memref<1x8x9xf32, #tpu.memory_space<vmem>>, %arg2: memref<10x8xf32, #tpu.memory_space<vmem>>, %arg3: memref<60x28xf32, #tpu.memory_space<vmem>>, %arg4: memref<158x128xf32, #tpu.memory_space<vmem>>, %arg5: memref<1x1x128xf32, #tpu.memory_space<vmem>>) attributes {dimension_semantics = [#tpu.dimension_semantics<parallel>], iteration_bounds = array<i64: 2>, scalar_prefetch = 0 : i64, scratch_operands = 0 : i64, tpu.core_type = #tpu.core_type<tc>, window_params = [{transform_indices = @transform_0, window_bounds = array<i64: 1, 8, 9>}, {pipeline_mode = #tpu.pipeline_mode<synchronous>, transform_indices = @transform_1, window_bounds = array<i64: 10, 8>}, {pipeline_mode = #tpu.pipeline_mode<synchronous>, transform_indices = @transform_2, window_bounds = array<i64: 60, 28>}, {pipeline_mode = #tpu.pipeline_mode<synchronous>, transform_indices = @transform_3, window_bounds = array<i64: 158, 128>}, {transform_indices = @transform_4, window_bounds = array<i64: 1, 1, 128>}]} {
    %c0 = arith.constant 0 : index
    %c0_0 = arith.constant 0 : index
    %c0_1 = arith.constant 0 : index
    %0 = vector.load %arg1[%c0, %c0_0, %c0_1] : memref<1x8x9xf32, #tpu.memory_space<vmem>>, vector<1x8x9xf32>
    %1 = vector.shape_cast %0 : vector<1x8x9xf32> to vector<8x9xf32>
    %c0_2 = arith.constant 0 : index
    %c0_3 = arith.constant 0 : index
    %2 = vector.load %arg3[%c0_2, %c0_3] : memref<60x28xf32, #tpu.memory_space<vmem>>, vector<60x28xf32>
    %3 = vector.extract_strided_slice %2 {offsets = [0, 0], sizes = [9, 28], strides = [1, 1]} : vector<60x28xf32> to vector<9x28xf32>
    %4 = vector.extract_strided_slice %2 {offsets = [16, 0], sizes = [8, 28], strides = [1, 1]} : vector<60x28xf32> to vector<8x28xf32>
    %5 = vector.extract_strided_slice %2 {offsets = [24, 0], sizes = [8, 28], strides = [1, 1]} : vector<60x28xf32> to vector<8x28xf32>
    %6 = vector.extract_strided_slice %2 {offsets = [32, 0], sizes = [28, 28], strides = [1, 1]} : vector<60x28xf32> to vector<28x28xf32>
    %c0_4 = arith.constant 0 : index
    %c0_5 = arith.constant 0 : index
    %7 = vector.load %arg2[%c0_4, %c0_5] : memref<10x8xf32, #tpu.memory_space<vmem>>, vector<10x8xf32>
    %cst = arith.constant dense<0.000000e+00> : vector<8x28xf32>
    %8 = tpu.matmul %1, %3, %cst {dimension_numbers = #tpu.dot_dimension_numbers<[1], [0], [0], [1], [0, 0, 1, 1], [], []>} : vector<8x9xf32>, vector<9x28xf32>, vector<8x28xf32> -> vector<8x28xf32>
    %9 = vector.extract_strided_slice %7 {offsets = [0, 0], sizes = [9, 8], strides = [1, 1]} : vector<10x8xf32> to vector<9x8xf32>
    %cst_6 = arith.constant dense<0.000000e+00> : vector<9x28xf32>
    %10 = tpu.matmul %9, %8, %cst_6 {dimension_numbers = #tpu.dot_dimension_numbers<[1], [0], [0], [1], [0, 0, 1, 1], [], []>} : vector<9x8xf32>, vector<8x28xf32>, vector<9x28xf32> -> vector<9x28xf32>
    %11 = vector.extract_strided_slice %10 {offsets = [0, 0], sizes = [8, 28], strides = [1, 1]} : vector<9x28xf32> to vector<8x28xf32>
    %12 = vector.extract_strided_slice %10 {offsets = [8, 0], sizes = [1, 28], strides = [1, 1]} : vector<9x28xf32> to vector<1x28xf32>
    %13 = arith.mulf %8, %4 : vector<8x28xf32>
    %14 = arith.mulf %11, %5 : vector<8x28xf32>
    %15 = arith.addf %13, %14 : vector<8x28xf32>
    %cst_7 = arith.constant dense<0.000000e+00> : vector<8x28xf32>
    %16 = tpu.matmul %15, %6, %cst_7 {dimension_numbers = #tpu.dot_dimension_numbers<[1], [0], [0], [1], [0, 0, 1, 1], [], []>} : vector<8x28xf32>, vector<28x28xf32>, vector<8x28xf32> -> vector<8x28xf32>
    %17 = vector.broadcast %12 : vector<1x28xf32> to vector<8x28xf32>
    %18 = arith.mulf %16, %17 : vector<8x28xf32>
    %cst_8 = arith.constant 0.000000e+00 : f32
    %19 = vector.broadcast %cst_8 : f32 to vector<8x28xf32>
    %20 = arith.cmpf oge, %18, %19 : vector<8x28xf32>
    %cst_9 = arith.constant 2.000000e-01 : f32
    %21 = vector.broadcast %cst_9 : f32 to vector<8x28xf32>
    %22 = arith.mulf %21, %18 : vector<8x28xf32>
    %23 = arith.select %20, %18, %22 : vector<8x28xi1>, vector<8x28xf32>
    %24 = vector.extract_strided_slice %7 {offsets = [9, 0], sizes = [1, 8], strides = [1, 1]} : vector<10x8xf32> to vector<1x8xf32>
    %cst_10 = arith.constant dense<0.000000e+00> : vector<1x28xf32>
    %25 = tpu.matmul %24, %23, %cst_10 {dimension_numbers = #tpu.dot_dimension_numbers<[1], [0], [0], [1], [0, 0, 1, 1], [], []>} : vector<1x8xf32>, vector<8x28xf32>, vector<1x28xf32> -> vector<1x28xf32>
    %c0_11 = arith.constant 0 : index
    %c0_12 = arith.constant 0 : index
    %26 = vector.load %arg4[%c0_11, %c0_12] : memref<158x128xf32, #tpu.memory_space<vmem>>, vector<158x128xf32>
    %27 = vector.extract_strided_slice %26 {offsets = [0, 0], sizes = [28, 128], strides = [1, 1]} : vector<158x128xf32> to vector<28x128xf32>
    %cst_13 = arith.constant dense<0.000000e+00> : vector<1x128xf32>
    %28 = tpu.matmul %25, %27, %cst_13 {dimension_numbers = #tpu.dot_dimension_numbers<[1], [0], [0], [1], [0, 0, 1, 1], [], []>} : vector<1x28xf32>, vector<28x128xf32>, vector<1x128xf32> -> vector<1x128xf32>
    %29 = vector.extract_strided_slice %26 {offsets = [28, 0], sizes = [1, 128], strides = [1, 1]} : vector<158x128xf32> to vector<1x128xf32>
    %30 = arith.addf %28, %29 : vector<1x128xf32>
    %cst_14 = arith.constant 0.000000e+00 : f32
    %31 = vector.broadcast %cst_14 : f32 to vector<1x128xf32>
    %32 = arith.cmpf oge, %30, %31 : vector<1x128xf32>
    %cst_15 = arith.constant 0.00999999977 : f32
    %33 = vector.broadcast %cst_15 : f32 to vector<1x128xf32>
    %34 = arith.mulf %33, %30 : vector<1x128xf32>
    %35 = arith.select %32, %30, %34 : vector<1x128xi1>, vector<1x128xf32>
    %36 = vector.extract_strided_slice %26 {offsets = [29, 0], sizes = [128, 128], strides = [1, 1]} : vector<158x128xf32> to vector<128x128xf32>
    %cst_16 = arith.constant dense<0.000000e+00> : vector<1x128xf32>
    %37 = tpu.matmul %35, %36, %cst_16 {dimension_numbers = #tpu.dot_dimension_numbers<[1], [0], [0], [1], [0, 0, 1, 1], [], []>} : vector<1x128xf32>, vector<128x128xf32>, vector<1x128xf32> -> vector<1x128xf32>
    %38 = vector.extract_strided_slice %26 {offsets = [157, 0], sizes = [1, 128], strides = [1, 1]} : vector<158x128xf32> to vector<1x128xf32>
    %39 = arith.addf %37, %38 : vector<1x128xf32>
    %40 = vector.shape_cast %39 : vector<1x128xf32> to vector<1x1x128xf32>
    %c0_17 = arith.constant 0 : index
    %c0_18 = arith.constant 0 : index
    %c0_19 = arith.constant 0 : index
    %41 = vector.load %arg5[%c0_17, %c0_18, %c0_19] : memref<1x1x128xf32, #tpu.memory_space<vmem>>, vector<1x1x128xf32>
    tpu.vector_store %arg5[%c0_17, %c0_18, %c0_19], %40 {strides = array<i32>} : memref<1x1x128xf32, #tpu.memory_space<vmem>>, vector<1x1x128xf32>,
    return
  }
  func.func @transform_0(%arg0: i32) -> (i32, i32, i32) {
    %c0_i32 = arith.constant 0 : i32
    %c0_i32_0 = arith.constant 0 : i32
    %c0_i32_1 = arith.constant 0 : i32
    return %arg0, %c0_i32, %c0_i32_0 : i32, i32, i32
  }
  func.func @transform_1(%arg0: i32) -> (i32, i32) {
    %c0_i32 = arith.constant 0 : i32
    %c0_i32_0 = arith.constant 0 : i32
    %c0_i32_1 = arith.constant 0 : i32
    return %c0_i32, %c0_i32_0 : i32, i32
  }
  func.func @transform_2(%arg0: i32) -> (i32, i32) {
    %c0_i32 = arith.constant 0 : i32
    %c0_i32_0 = arith.constant 0 : i32
    %c0_i32_1 = arith.constant 0 : i32
    return %c0_i32, %c0_i32_0 : i32, i32
  }
  func.func @transform_3(%arg0: i32) -> (i32, i32) {
    %c0_i32 = arith.constant 0 : i32
    %c0_i32_0 = arith.constant 0 : i32
    %c0_i32_1 = arith.constant 0 : i32
    return %c0_i32, %c0_i32_0 : i32, i32
  }
  func.func @transform_4(%arg0: i32) -> (i32, i32, i32) {
    %c0_i32 = arith.constant 0 : i32
    %c0_i32_0 = arith.constant 0 : i32
    %c0_i32_1 = arith.constant 0 : i32
    return %arg0, %c0_i32, %c0_i32_0 : i32, i32, i32
  }
}

</mosaic_0001>

<llo_original>
// kernel: gat_forward.1
$region0: #{gat_forward.1}
  #allocation0 [shape = 'u32[]', space=smem, size = 0x4, offset = 0x4, fixed_abs, tag = 'smem constant byte address 0x4 - core index']
  #allocation1 [shape = 'u32[144,128]{1,0:T(1,128)}', space=vmem, size = 0x12000, scoped, tag = 'internal scratch']
  %s0 = inlined_call_operand.vmem [shape: f32[2,8,9], index: 0, kind: input, shape index: {}]
  %s1 = inlined_call_operand.vmem [shape: f32[10,8], index: 1, kind: input, shape index: {}]
  %s2 = inlined_call_operand.vmem [shape: f32[60,28], index: 2, kind: input, shape index: {}]
  %s3 = inlined_call_operand.hbm [shape: f32[158,128], index: 3, kind: input, shape index: {}]
  %s4 = inlined_call_operand.hbm [shape: f32[2,1,128], index: 4, kind: output, shape index: {}]
  %s5 = sld [smem:[#allocation0]]
  $region53: #{gat_forward.1} parent=0
    _
  %s7 = ssub.s32 1, %s5
  %s8 = scalar_select 0, %s7, %s5
  $region1: #{gat_forward.1} parent=0
    #allocation2 [shape = 'u8[81920]{0}', space=vmem, size = 0x14000, scoped, tag = 'input window, operand 3, single buffered']
    #allocation3 [shape = 's32[2]{0}', space=sflag, size = 0x8, scoped, tag = 'scoped memory for gat_forward.1']
    #allocation4 [shape = 's32[2]{0}', space=sflag, size = 0x8, scoped, tag = 'scoped memory for gat_forward.1']
    #allocation5 [shape = 'u8[1024]{0}', space=vmem, size = 0x400, scoped, tag = 'output window, operand 0']
    %9 = vsyncpa [#allocation3], 0
    %10 = vsyncpa [#allocation4], 0
    %s11 = scalar_lea.sflag [#allocation4], 1
    %12 = vsyncpa %s11, 0
    loop: start=0, step=1, limit=4
    $region2: #{gat_forward.1} parent=1 // loop_pre_header
      _
    $region3: #{gat_forward.1} parent=1 // loop_header
      %s14 = sphi 0, %s18
      %p15 = scmp.ge.s32.totalorder %s14, 4
      %s24 = sphi 0, %s26
      %s27 = sphi 0, %s24
      %s28 = sphi 0, %s27
      %s44 = sphi 0, %s28
      %s48 = sphi 0, %s48
      %s50 = sphi 0, %s48
      %s51 = sphi 0, %s50
      %s65 = sphi 0, %s51
      %s69 = sphi 0, %s69
      %s71 = sphi 0, %s69
      %s72 = sphi 0, %s71
      %s86 = sphi 0, %s72
      %s90 = sphi 0, %s90
      %s92 = sphi 0, %s90
      %s93 = sphi 0, %s92
      %s107 = sphi 0, %s93
      %s113 = sphi 0, %s115
      %s116 = sphi 0, %s113
      %s117 = sphi 0, %s116
      %s133 = sphi 0, %s117
    $region4: #{gat_forward.1} parent=1 // loop_header_branch
      %17 = sbr.rel (%p15) target = $region8
    $region5: #{gat_forward.1} parent=1 // loop_body
      %s19 = ssub.s32 %s14, 1
      %s20 = ssub.s32 %s14, 2
      %s21 = sadd.s32 %s14, 1
      %s22 = ssub.s32 %s14, %s21
      %p23 = scmp.eq.s32.totalorder %s22, 0
      %s25 = sadd.s32 %s24, 1
      %s26 = scalar_select %p23, %s24, %s25
      %p29 = pneg %p23
      %p30 = scmp.eq.s32.totalorder %s14, 1
      %p31 = por %p29, %p30
      %p32 = scmp.ne.s32.totalorder %s24, %s27
      %p33 = scmp.eq.s32.totalorder %s14, 0
      %p34 = por %p32, %p33
      %p35 = scmp.ne.s32.totalorder %s24, %s27
      %p36 = scmp.eq.s32.totalorder %s19, 1
      %p37 = por %p35, %p36
      %p38 = scmp.ne.s32.totalorder %s27, %s28
      %p39 = scmp.eq.s32.totalorder %s19, 0
      %p40 = por %p38, %p39
      %p41 = scmp.ne.s32.totalorder %s27, %s28
      %p42 = scmp.eq.s32.totalorder %s20, 1
      %p43 = por %p41, %p42
      %p45 = scmp.ne.s32.totalorder %s28, %s44
      %p46 = scmp.eq.s32.totalorder %s20, 0
      %p47 = por %p45, %p46
      %s49 = sadd.s32 %s48, 1
      %p52 = scmp.eq.s32.totalorder %s14, 1
      %p53 = scmp.ne.s32.totalorder %s48, %s50
      %p54 = scmp.eq.s32.totalorder %s14, 0
      %p55 = por %p53, %p54
      %p56 = scmp.ne.s32.totalorder %s48, %s50
      %p57 = scmp.eq.s32.totalorder %s19, 1
      %p58 = por %p56, %p57
      %p59 = scmp.ne.s32.totalorder %s50, %s51
      %p60 = scmp.eq.s32.totalorder %s19, 0
      %p61 = por %p59, %p60
      %p62 = scmp.ne.s32.totalorder %s50, %s51
      %p63 = scmp.eq.s32.totalorder %s20, 1
      %p64 = por %p62, %p63
      %p66 = scmp.ne.s32.totalorder %s51, %s65
      %p67 = scmp.eq.s32.totalorder %s20, 0
      %p68 = por %p66, %p67
      %s70 = sadd.s32 %s69, 1
      %p73 = scmp.eq.s32.totalorder %s14, 1
      %p74 = scmp.ne.s32.totalorder %s69, %s71
      %p75 = scmp.eq.s32.totalorder %s14, 0
      %p76 = por %p74, %p75
      %p77 = scmp.ne.s32.totalorder %s69, %s71
      %p78 = scmp.eq.s32.totalorder %s19, 1
      %p79 = por %p77, %p78
      %p80 = scmp.ne.s32.totalorder %s71, %s72
      %p81 = scmp.eq.s32.totalorder %s19, 0
      %p82 = por %p80, %p81
      %p83 = scmp.ne.s32.totalorder %s71, %s72
      %p84 = scmp.eq.s32.totalorder %s20, 1
      %p85 = por %p83, %p84
      %p87 = scmp.ne.s32.totalorder %s72, %s86
      %p88 = scmp.eq.s32.totalorder %s20, 0
      %p89 = por %p87, %p88
      %s91 = sadd.s32 %s90, 1
      %p94 = scmp.eq.s32.totalorder %s14, 1
      %p95 = scmp.ne.s32.totalorder %s90, %s92
      %p96 = scmp.eq.s32.totalorder %s14, 0
      %p97 = por %p95, %p96
      %p98 = scmp.ne.s32.totalorder %s90, %s92
      %p99 = scmp.eq.s32.totalorder %s19, 1
      %p100 = por %p98, %p99
      %p101 = scmp.ne.s32.totalorder %s92, %s93
      %p102 = scmp.eq.s32.totalorder %s19, 0
      %p103 = por %p101, %p102
      %p104 = scmp.ne.s32.totalorder %s92, %s93
      %p105 = scmp.eq.s32.totalorder %s20, 1
      %p106 = por %p104, %p105
      %p108 = scmp.ne.s32.totalorder %s93, %s107
      %p109 = scmp.eq.s32.totalorder %s20, 0
      %p110 = por %p108, %p109
      %s111 = ssub.s32 %s14, %s21
      %p112 = scmp.eq.s32.totalorder %s111, 0
      %s114 = sadd.s32 %s113, 1
      %s115 = scalar_select %p112, %s113, %s114
      %p118 = pneg %p112
      %p119 = scmp.eq.s32.totalorder %s14, 1
      %p120 = por %p118, %p119
      %p121 = scmp.ne.s32.totalorder %s113, %s116
      %p122 = scmp.eq.s32.totalorder %s14, 0
      %p123 = por %p121, %p122
      %p124 = scmp.ne.s32.totalorder %s113, %s116
      %p125 = scmp.eq.s32.totalorder %s19, 1
      %p126 = por %p124, %p125
      %p127 = scmp.ne.s32.totalorder %s116, %s117
      %p128 = scmp.eq.s32.totalorder %s19, 0
      %p129 = por %p127, %p128
      %p130 = scmp.ne.s32.totalorder %s116, %s117
      %p131 = scmp.eq.s32.totalorder %s20, 1
      %p132 = por %p130, %p131
      %p134 = scmp.ne.s32.totalorder %s117, %s133
      %p135 = scmp.eq.s32.totalorder %s20, 0
      %p136 = por %p134, %p135
      %p137 = scmp.le.s32.totalorder 1, %s14
      %p138 = scmp.lt.s32.totalorder %s14, 3
      %p139 = pnand %p137, %p138
      %p140 = pneg %p139
      // Predicated region
      $region9: #{gat_forward.1} parent=5 // pred_check
        _
      $region10: #{gat_forward.1} parent=5 // pred_check_branch
        %142 = sbr.rel (%p139) target = $region12
      $region11: #{gat_forward.1} parent=5 // pred_region
        %s143 = ssub.s32 %s14, 1
        // Predicated region
        $region13: #{gat_forward.1} parent=11 // pred_check
          %p144 = pneg %p61
        $region14: #{gat_forward.1} parent=11 // pred_check_branch
          %146 = sbr.rel (%p144) target = $region16
        $region15: #{gat_forward.1} parent=11 // pred_region
          _
        $region16: #{gat_forward.1} parent=11 // pred_fallthru
          _
        // Predicated region
        $region17: #{gat_forward.1} parent=11 // pred_check
          %p147 = pneg %p82
        $region18: #{gat_forward.1} parent=11 // pred_check_branch
          %149 = sbr.rel (%p147) target = $region20
        $region19: #{gat_forward.1} parent=11 // pred_region
          _
        $region20: #{gat_forward.1} parent=11 // pred_fallthru
          _
        // Predicated region
        $region21: #{gat_forward.1} parent=11 // pred_check
          %p150 = pneg %p103
        $region22: #{gat_forward.1} parent=11 // pred_check_branch
          %152 = sbr.rel (%p150) target = $region24
        $region23: #{gat_forward.1} parent=11 // pred_region
          %s154 = ssub.s32 2560, 2560
          %155 = vsyncadd [#allocation3], %s154
          %s156 = sshll.u32 [#allocation2], 4
          %s157 = int_to_ptr.vmem [resolvable:$true] %s156
          %162 = dma.hbm_to_vmem [thread:$0]  %s3, 2560, %s157, [#allocation3], 128, 128, 8
        $region24: #{gat_forward.1} parent=11 // pred_fallthru
          _
      $region12: #{gat_forward.1} parent=5 // pred_fallthru
        _
      %p163 = scmp.lt.s32.totalorder %s14, 2
      // Predicated region
      $region25: #{gat_forward.1} parent=5 // pred_check
        %p164 = pneg %p163
      $region26: #{gat_forward.1} parent=5 // pred_check_branch
        %166 = sbr.rel (%p164) target = $region28
      $region27: #{gat_forward.1} parent=5 // pred_region
        // Predicated region
        $region29: #{gat_forward.1} parent=27 // pred_check
          %p167 = pneg %p34
        $region30: #{gat_forward.1} parent=27 // pred_check_branch
          %169 = sbr.rel (%p167) target = $region32
        $region31: #{gat_forward.1} parent=27 // pred_region
          %p170 = scmp.lt.s32.totalorder %s14, 1
          %s171 = scalar_select %p170, %s14, 1
          %s172 = smul.addr %s171, 8
          %s173 = scalar_lea.vmem %s0, %s172
        $region32: #{gat_forward.1} parent=27 // pred_fallthru
          _
      $region28: #{gat_forward.1} parent=5 // pred_fallthru
        _
      %p174 = scmp.le.s32.totalorder 1, %s14
      %p175 = scmp.lt.s32.totalorder %s14, 3
      %p176 = pnand %p174, %p175
      %p177 = pneg %p176
      // Predicated region
      $region33: #{gat_forward.1} parent=5 // pred_check
        _
      $region34: #{gat_forward.1} parent=5 // pred_check_branch
        %179 = sbr.rel (%p176) target = $region36
      $region35: #{gat_forward.1} parent=5 // pred_region
        %s180 = ssub.s32 %s14, 1
        // Predicated region
        $region37: #{gat_forward.1} parent=35 // pred_check
          %p181 = pneg %p103
        $region38: #{gat_forward.1} parent=35 // pred_check_branch
          %183 = sbr.rel (%p181) target = $region40
        $region39: #{gat_forward.1} parent=35 // pred_region
          %184 = dma.done [#allocation3], 2560
        $region40: #{gat_forward.1} parent=35 // pred_fallthru
          _
        %p185 = scmp.lt.s32.totalorder %s19, 1
        %s186 = scalar_select %p185, %s19, 1
        %s187 = smul.addr %s186, 8
        %s188 = scalar_lea.vmem %s0, %s187
        %p189 = pneg %p40
        %p190 = pneg %p37
        %p191 = pneg %p61
        %p192 = pneg %p58
        %p193 = pneg %p82
        %p194 = pneg %p79
        %p195 = pneg %p103
        %p196 = pneg %p100
        %p197 = pneg %p129
        %p198 = pneg %p126
        %s199 = sand.u32 %s116, 1
        %s200 = scalar_lea.sflag [#allocation4], %s199
        %s201 = sand.u32 %s116, 1
        %s202 = scalar_lea.vmem [#allocation5], %s201
        %p203 = scmp.lt.s32.totalorder %s19, 1
        %s204 = scalar_select %p203, %s19, 1
        %s205 = smul.addr %s204, 8
        %s206 = scalar_lea.vmem %s0, %s205
        %v207 = vld [vmem:[%s206] sm:$0xff]
        %v208 = vld [vmem:[%s2] sm:$0xff]
        %v209 = vld [vmem:[%s2 + $0x8] sm:$0xff]
        %v210 = vld [vmem:[%s2 + $0x10] sm:$0xff]
        %v211 = vld [vmem:[%s2 + $0x18] sm:$0xff]
        %v212 = vld [vmem:[%s2 + $0x20] sm:$0xff]
        %v213 = vld [vmem:[%s2 + $0x28] sm:$0xff]
        %v214 = vld [vmem:[%s2 + $0x30] sm:$0xff]
        %v215 = vld [vmem:[%s2 + $0x38] sm:$0xf]
        %v216 = vld [vmem:[%s1] sm:$0xff]
        %v217 = vld [vmem:[%s1 + $0x8] sm:$0x3]
        %vm218 = vcmask 72704
        %v220 = vsel %vm218, %v207, 0
        %vm222 = vcmask 1040384
        %v224 = vsel %vm222, %v209, 0
        %226 = vmatprep.subr.mxu0 0.0
        %227 = vmatpush1.msra.mxu0 0.0
        %228 = vmatprep.subr.mxu0 0.0
        %229 = vmatpush1.msra.mxu0 0.0
        %230 = vmatprep.subr.mxu0 0.0
        %231 = vmatpush1.msra.mxu0 0.0
        %232 = vmatprep.subr.mxu0 0.0
        %233 = vmatpush1.msra.mxu0 0.0
        %234 = vmatprep.subr.mxu0 0.0
        %235 = vmatpush1.msra.mxu0 0.0
        %236 = vmatprep.subr.mxu0 0.0
        %237 = vmatpush1.msra.mxu0 0.0
        %238 = vmatprep.subr.mxu0 0.0
        %239 = vmatpush1.msra.mxu0 0.0
        %240 = vmatprep.subr.mxu0 0.0
        %241 = vmatpush1.msra.mxu0 0.0
        %242 = vmatprep.subr.mxu0 0.0
        %243 = vmatpush1.msra.mxu0 0.0
        %244 = vmatprep.subr.mxu0 0.0
        %245 = vmatpush1.msra.mxu0 0.0
        %246 = vmatprep.subr.mxu0 0.0
        %247 = vmatpush1.msra.mxu0 0.0
        %248 = vmatprep.subr.mxu0 0.0
        %249 = vmatpush1.msra.mxu0 0.0
        %250 = vmatprep.subr.mxu0 0.0
        %251 = vmatpush1.msra.mxu0 0.0
        %252 = vmatprep.subr.mxu0 0.0
        %253 = vmatpush1.msra.mxu0 0.0
        %254 = vmatprep.subr.mxu0 0.0
        %255 = vmatpush1.msra.mxu0 %v224
        %256 = vmatprep.subr.mxu0 0.0
        %257 = vmatpush1.msra.mxu0 %v208
        %258 = vmatprep.subr.mxu0 0.0
        %259 = vmatpush2.msra.mxu0 0.0
        %260 = vmatprep.subr.mxu0 0.0
        %261 = vmatpush2.msra.mxu0 0.0
        %262 = vmatprep.subr.mxu0 0.0
        %263 = vmatpush2.msra.mxu0 0.0
        %264 = vmatprep.subr.mxu0 0.0
        %265 = vmatpush2.msra.mxu0 0.0
        %266 = vmatprep.subr.mxu0 0.0
        %267 = vmatpush2.msra.mxu0 0.0
        %268 = vmatprep.subr.mxu0 0.0
        %269 = vmatpush2.msra.mxu0 0.0
        %270 = vmatprep.subr.mxu0 0.0
        %271 = vmatpush2.msra.mxu0 0.0
        %272 = vmatprep.subr.mxu0 0.0
        %273 = vmatpush2.msra.mxu0 0.0
        %274 = vmatprep.subr.mxu0 0.0
        %275 = vmatpush2.msra.mxu0 0.0
        %276 = vmatprep.subr.mxu0 0.0
        %277 = vmatpush2.msra.mxu0 0.0
        %278 = vmatprep.subr.mxu0 0.0
        %279 = vmatpush2.msra.mxu0 0.0
        %280 = vmatprep.subr.mxu0 0.0
        %281 = vmatpush2.msra.mxu0 0.0
        %282 = vmatprep.subr.mxu0 0.0
        %283 = vmatpush2.msra.mxu0 0.0
        %284 = vmatprep.subr.mxu0 0.0
        %285 = vmatpush2.msra.mxu0 0.0
        %286 = vmatprep.subr.mxu0 0.0
        %287 = vmatpush2.msra.mxu0 0.0
        %288 = vmatprep.subr.mxu0 0.0
        %289 = vmatpush2.msra.mxu0 0.0
        %290 = vmatprep.mubr.f32.mxu0 0.0
        %291 = vmatmul.mubr.f32.gmra.mxu0 %v220
        %v292 = vpop.f32.mrf.mxu0
        %v293 = vadd.f32 0.0, %v292
        %v294 = vpop.f32.mrf.mxu0
        %295 = vdwg.mxu0
        %vm296 = vcmask 64512
        %v298 = vsel %vm296, %v216, 0
        %v301 = vsel %vm296, %v217, 0
        %303 = vmatprep.subr.mxu0 0.0
        %304 = vmatpush1.msra.mxu0 0.0
        %305 = vmatprep.subr.mxu0 0.0
        %306 = vmatpush1.msra.mxu0 0.0
        %307 = vmatprep.subr.mxu0 0.0
        %308 = vmatpush1.msra.mxu0 0.0
        %309 = vmatprep.subr.mxu0 0.0
        %310 = vmatpush1.msra.mxu0 0.0
        %311 = vmatprep.subr.mxu0 0.0
        %312 = vmatpush1.msra.mxu0 0.0
        %313 = vmatprep.subr.mxu0 0.0
        %314 = vmatpush1.msra.mxu0 0.0
        %315 = vmatprep.subr.mxu0 0.0
        %316 = vmatpush1.msra.mxu0 0.0
        %317 = vmatprep.subr.mxu0 0.0
        %318 = vmatpush1.msra.mxu0 0.0
        %319 = vmatprep.subr.mxu0 0.0
        %320 = vmatpush1.msra.mxu0 0.0
        %321 = vmatprep.subr.mxu0 0.0
        %322 = vmatpush1.msra.mxu0 0.0
        %323 = vmatprep.subr.mxu0 0.0
        %324 = vmatpush1.msra.mxu0 0.0
        %325 = vmatprep.subr.mxu0 0.0
        %326 = vmatpush1.msra.mxu0 0.0
        %327 = vmatprep.subr.mxu0 0.0
        %328 = vmatpush1.msra.mxu0 0.0
        %329 = vmatprep.subr.mxu0 0.0
        %330 = vmatpush1.msra.mxu0 0.0
        %331 = vmatprep.subr.mxu0 0.0
        %332 = vmatpush1.msra.mxu0 0.0
        %333 = vmatprep.subr.mxu0 0.0
        %334 = vmatpush1.msra.mxu0 %v293
        %335 = vmatprep.subr.mxu0 0.0
        %336 = vmatpush2.msra.mxu0 0.0
        %337 = vmatprep.subr.mxu0 0.0
        %338 = vmatpush2.msra.mxu0 0.0
        %339 = vmatprep.subr.mxu0 0.0
        %340 = vmatpush2.msra.mxu0 0.0
        %341 = vmatprep.subr.mxu0 0.0
        %342 = vmatpush2.msra.mxu0 0.0
        %343 = vmatprep.subr.mxu0 0.0
        %344 = vmatpush2.msra.mxu0 0.0
        %345 = vmatprep.subr.mxu0 0.0
        %346 = vmatpush2.msra.mxu0 0.0
        %347 = vmatprep.subr.mxu0 0.0
        %348 = vmatpush2.msra.mxu0 0.0
        %349 = vmatprep.subr.mxu0 0.0
        %350 = vmatpush2.msra.mxu0 0.0
        %351 = vmatprep.subr.mxu0 0.0
        %352 = vmatpush2.msra.mxu0 0.0
        %353 = vmatprep.subr.mxu0 0.0
        %354 = vmatpush2.msra.mxu0 0.0
        %355 = vmatprep.subr.mxu0 0.0
        %356 = vmatpush2.msra.mxu0 0.0
        %357 = vmatprep.subr.mxu0 0.0
        %358 = vmatpush2.msra.mxu0 0.0
        %359 = vmatprep.subr.mxu0 0.0
        %360 = vmatpush2.msra.mxu0 0.0
        %361 = vmatprep.subr.mxu0 0.0
        %362 = vmatpush2.msra.mxu0 0.0
        %363 = vmatprep.subr.mxu0 0.0
        %364 = vmatpush2.msra.mxu0 0.0
        %365 = vmatprep.subr.mxu0 0.0
        %366 = vmatpush2.msra.mxu0 0.0
        %367 = vmatprep.mubr.f32.mxu0 0.0
        %368 = vmatmul.mubr.f32.gmra.mxu0 %v298
        %v369 = vpop.f32.mrf.mxu0
        %v370 = vadd.f32 0.0, %v369
        %v371 = vpop.f32.mrf.mxu0
        %372 = vmatprep.mubr.f32.mxu0 0.0
        %373 = vmatmul.mubr.f32.gmra.mxu0 %v301
        %v374 = vpop.f32.mrf.mxu0
        %v375 = vadd.f32 0.0, %v374
        %v376 = vpop.f32.mrf.mxu0
        %377 = vdwg.mxu0
        %v378 = vmul.f32 %v293, %v210
        %v379 = vmul.f32 %v370, %v211
        %v380 = vadd.f32 %v378, %v379
        %vm381 = vcmask 228352
        %v383 = vsel %vm381, %v380, 0
        %vm385 = vcmask 1043456
        %v387 = vsel %vm385, %v215, 0
        %389 = vmatprep.subr.mxu0 0.0
        %390 = vmatpush1.msra.mxu0 0.0
        %391 = vmatprep.subr.mxu0 0.0
        %392 = vmatpush1.msra.mxu0 0.0
        %393 = vmatprep.subr.mxu0 0.0
        %394 = vmatpush1.msra.mxu0 0.0
        %395 = vmatprep.subr.mxu0 0.0
        %396 = vmatpush1.msra.mxu0 0.0
        %397 = vmatprep.subr.mxu0 0.0
        %398 = vmatpush1.msra.mxu0 0.0
        %399 = vmatprep.subr.mxu0 0.0
        %400 = vmatpush1.msra.mxu0 0.0
        %401 = vmatprep.subr.mxu0 0.0
        %402 = vmatpush1.msra.mxu0 0.0
        %403 = vmatprep.subr.mxu0 0.0
        %404 = vmatpush1.msra.mxu0 0.0
        %405 = vmatprep.subr.mxu0 0.0
        %406 = vmatpush1.msra.mxu0 0.0
        %407 = vmatprep.subr.mxu0 0.0
        %408 = vmatpush1.msra.mxu0 0.0
        %409 = vmatprep.subr.mxu0 0.0
        %410 = vmatpush1.msra.mxu0 0.0
        %411 = vmatprep.subr.mxu0 0.0
        %412 = vmatpush1.msra.mxu0 0.0
        %413 = vmatprep.subr.mxu0 0.0
        %414 = vmatpush1.msra.mxu0 %v387
        %415 = vmatprep.subr.mxu0 0.0
        %416 = vmatpush1.msra.mxu0 %v214
        %417 = vmatprep.subr.mxu0 0.0
        %418 = vmatpush1.msra.mxu0 %v213
        %419 = vmatprep.subr.mxu0 0.0
        %420 = vmatpush1.msra.mxu0 %v212
        %421 = vmatprep.subr.mxu0 0.0
        %422 = vmatpush2.msra.mxu0 0.0
        %423 = vmatprep.subr.mxu0 0.0
        %424 = vmatpush2.msra.mxu0 0.0
        %425 = vmatprep.subr.mxu0 0.0
        %426 = vmatpush2.msra.mxu0 0.0
        %427 = vmatprep.subr.mxu0 0.0
        %428 = vmatpush2.msra.mxu0 0.0
        %429 = vmatprep.subr.mxu0 0.0
        %430 = vmatpush2.msra.mxu0 0.0
        %431 = vmatprep.subr.mxu0 0.0
        %432 = vmatpush2.msra.mxu0 0.0
        %433 = vmatprep.subr.mxu0 0.0
        %434 = vmatpush2.msra.mxu0 0.0
        %435 = vmatprep.subr.mxu0 0.0
        %436 = vmatpush2.msra.mxu0 0.0
        %437 = vmatprep.subr.mxu0 0.0
        %438 = vmatpush2.msra.mxu0 0.0
        %439 = vmatprep.subr.mxu0 0.0
        %440 = vmatpush2.msra.mxu0 0.0
        %441 = vmatprep.subr.mxu0 0.0
        %442 = vmatpush2.msra.mxu0 0.0
        %443 = vmatprep.subr.mxu0 0.0
        %444 = vmatpush2.msra.mxu0 0.0
        %445 = vmatprep.subr.mxu0 0.0
        %446 = vmatpush2.msra.mxu0 0.0
        %447 = vmatprep.subr.mxu0 0.0
        %448 = vmatpush2.msra.mxu0 0.0
        %449 = vmatprep.subr.mxu0 0.0
        %450 = vmatpush2.msra.mxu0 0.0
        %451 = vmatprep.subr.mxu0 0.0
        %452 = vmatpush2.msra.mxu0 0.0
        %453 = vmatprep.mubr.f32.mxu0 0.0
        %454 = vmatmul.mubr.f32.gmra.mxu0 %v383
        %v455 = vpop.f32.mrf.mxu0
        %v456 = vadd.f32 0.0, %v455
        %v457 = vpop.f32.mrf.mxu0
        %458 = vdwg.mxu0
        %v459 = vlaneseq
        %v460 = vshrl.u32 %v459, 7
        %v461 = vsub.s32 0, %v460
        %v462 = vrot.slane %v375, %v461
        %v463 = vmul.f32 %v456, %v462
        %vm464 = vcmp.ge.f32.partialorder %v463, 0.0
        %v465 = vmul.f32 %v463, 0.2
        %v466 = vsel %vm464, %v463, %v465
        %v467 = vrot.slane %v217, 1
        %v468 = vsel %vm296, %v467, 0
        %470 = vmatprep.subr.mxu0 0.0
        %471 = vmatpush1.msra.mxu0 0.0
        %472 = vmatprep.subr.mxu0 0.0
        %473 = vmatpush1.msra.mxu0 0.0
        %474 = vmatprep.subr.mxu0 0.0
        %475 = vmatpush1.msra.mxu0 0.0
        %476 = vmatprep.subr.mxu0 0.0
        %477 = vmatpush1.msra.mxu0 0.0
        %478 = vmatprep.subr.mxu0 0.0
        %479 = vmatpush1.msra.mxu0 0.0
        %480 = vmatprep.subr.mxu0 0.0
        %481 = vmatpush1.msra.mxu0 0.0
        %482 = vmatprep.subr.mxu0 0.0
        %483 = vmatpush1.msra.mxu0 0.0
        %484 = vmatprep.subr.mxu0 0.0
        %485 = vmatpush1.msra.mxu0 0.0
        %486 = vmatprep.subr.mxu0 0.0
        %487 = vmatpush1.msra.mxu0 0.0
        %488 = vmatprep.subr.mxu0 0.0
        %489 = vmatpush1.msra.mxu0 0.0
        %490 = vmatprep.subr.mxu0 0.0
        %491 = vmatpush1.msra.mxu0 0.0
        %492 = vmatprep.subr.mxu0 0.0
        %493 = vmatpush1.msra.mxu0 0.0
        %494 = vmatprep.subr.mxu0 0.0
        %495 = vmatpush1.msra.mxu0 0.0
        %496 = vmatprep.subr.mxu0 0.0
        %497 = vmatpush1.msra.mxu0 0.0
        %498 = vmatprep.subr.mxu0 0.0
        %499 = vmatpush1.msra.mxu0 0.0
        %500 = vmatprep.subr.mxu0 0.0
        %501 = vmatpush1.msra.mxu0 %v466
        %502 = vmatprep.subr.mxu0 0.0
        %503 = vmatpush2.msra.mxu0 0.0
        %504 = vmatprep.subr.mxu0 0.0
        %505 = vmatpush2.msra.mxu0 0.0
        %506 = vmatprep.subr.mxu0 0.0
        %507 = vmatpush2.msra.mxu0 0.0
        %508 = vmatprep.subr.mxu0 0.0
        %509 = vmatpush2.msra.mxu0 0.0
        %510 = vmatprep.subr.mxu0 0.0
        %511 = vmatpush2.msra.mxu0 0.0
        %512 = vmatprep.subr.mxu0 0.0
        %513 = vmatpush2.msra.mxu0 0.0
        %514 = vmatprep.subr.mxu0 0.0
        %515 = vmatpush2.msra.mxu0 0.0
        %516 = vmatprep.subr.mxu0 0.0
        %517 = vmatpush2.msra.mxu0 0.0
        %518 = vmatprep.subr.mxu0 0.0
        %519 = vmatpush2.msra.mxu0 0.0
        %520 = vmatprep.subr.mxu0 0.0
        %521 = vmatpush2.msra.mxu0 0.0
        %522 = vmatprep.subr.mxu0 0.0
        %523 = vmatpush2.msra.mxu0 0.0
        %524 = vmatprep.subr.mxu0 0.0
        %525 = vmatpush2.msra.mxu0 0.0
        %526 = vmatprep.subr.mxu0 0.0
        %527 = vmatpush2.msra.mxu0 0.0
        %528 = vmatprep.subr.mxu0 0.0
        %529 = vmatpush2.msra.mxu0 0.0
        %530 = vmatprep.subr.mxu0 0.0
        %531 = vmatpush2.msra.mxu0 0.0
        %532 = vmatprep.subr.mxu0 0.0
        %533 = vmatpush2.msra.mxu0 0.0
        %534 = vmatprep.mubr.f32.mxu0 0.0
        %535 = vmatmul.mubr.f32.gmra.mxu0 %v468
        %v536 = vpop.f32.mrf.mxu0
        %v537 = vadd.f32 0.0, %v536
        %v538 = vpop.f32.mrf.mxu0
        %539 = vdwg.mxu0
        %v540 = vld [vmem:[#allocation2] sm:$0xff]
        %v541 = vld [vmem:[#allocation2 + $0x8] sm:$0xff]
        %v542 = vld [vmem:[#allocation2 + $0x10] sm:$0xff]
        %v543 = vld [vmem:[#allocation2 + $0x18] sm:$0xff]
        %v544 = vld [vmem:[#allocation2 + $0x20] sm:$0xff]
        %v545 = vld [vmem:[#allocation2 + $0x28] sm:$0xff]
        %v546 = vld [vmem:[#allocation2 + $0x30] sm:$0xff]
        %v547 = vld [vmem:[#allocation2 + $0x38] sm:$0xff]
        %v548 = vld [vmem:[#allocation2 + $0x40] sm:$0xff]
        %v549 = vld [vmem:[#allocation2 + $0x48] sm:$0xff]
        %v550 = vld [vmem:[#allocation2 + $0x50] sm:$0xff]
        %v551 = vld [vmem:[#allocation2 + $0x58] sm:$0xff]
        %v552 = vld [vmem:[#allocation2 + $0x60] sm:$0xff]
        %v553 = vld [vmem:[#allocation2 + $0x68] sm:$0xff]
        %v554 = vld [vmem:[#allocation2 + $0x70] sm:$0xff]
        %v555 = vld [vmem:[#allocation2 + $0x78] sm:$0xff]
        %v556 = vld [vmem:[#allocation2 + $0x80] sm:$0xff]
        %v557 = vld [vmem:[#allocation2 + $0x88] sm:$0xff]
        %v558 = vld [vmem:[#allocation2 + $0x90] sm:$0xff]
        %v559 = vld [vmem:[#allocation2 + $0x98] sm:$0x3f]
        %v561 = vrot.slane %v543, 4
        %v564 = vsel %vm381, %v537, 0
        %v566 = vsel %vm385, %v543, 0
        %568 = vmatprep.subr.mxu0 0.0
        %569 = vmatpush1.msra.mxu0 0.0
        %570 = vmatprep.subr.mxu0 0.0
        %571 = vmatpush1.msra.mxu0 0.0
        %572 = vmatprep.subr.mxu0 0.0
        %573 = vmatpush1.msra.mxu0 0.0
        %574 = vmatprep.subr.mxu0 0.0
        %575 = vmatpush1.msra.mxu0 0.0
        %576 = vmatprep.subr.mxu0 0.0
        %577 = vmatpush1.msra.mxu0 0.0
        %578 = vmatprep.subr.mxu0 0.0
        %579 = vmatpush1.msra.mxu0 0.0
        %580 = vmatprep.subr.mxu0 0.0
        %581 = vmatpush1.msra.mxu0 0.0
        %582 = vmatprep.subr.mxu0 0.0
        %583 = vmatpush1.msra.mxu0 0.0
        %584 = vmatprep.subr.mxu0 0.0
        %585 = vmatpush1.msra.mxu0 0.0
        %586 = vmatprep.subr.mxu0 0.0
        %587 = vmatpush1.msra.mxu0 0.0
        %588 = vmatprep.subr.mxu0 0.0
        %589 = vmatpush1.msra.mxu0 0.0
        %590 = vmatprep.subr.mxu0 0.0
        %591 = vmatpush1.msra.mxu0 0.0
        %592 = vmatprep.subr.mxu0 0.0
        %593 = vmatpush1.msra.mxu0 %v566
        %594 = vmatprep.subr.mxu0 0.0
        %595 = vmatpush1.msra.mxu0 %v542
        %596 = vmatprep.subr.mxu0 0.0
        %597 = vmatpush1.msra.mxu0 %v541
        %598 = vmatprep.subr.mxu0 0.0
        %599 = vmatpush1.msra.mxu0 %v540
        %600 = vmatprep.subr.mxu0 0.0
        %601 = vmatpush2.msra.mxu0 0.0
        %602 = vmatprep.subr.mxu0 0.0
        %603 = vmatpush2.msra.mxu0 0.0
        %604 = vmatprep.subr.mxu0 0.0
        %605 = vmatpush2.msra.mxu0 0.0
        %606 = vmatprep.subr.mxu0 0.0
        %607 = vmatpush2.msra.mxu0 0.0
        %608 = vmatprep.subr.mxu0 0.0
        %609 = vmatpush2.msra.mxu0 0.0
        %610 = vmatprep.subr.mxu0 0.0
        %611 = vmatpush2.msra.mxu0 0.0
        %612 = vmatprep.subr.mxu0 0.0
        %613 = vmatpush2.msra.mxu0 0.0
        %614 = vmatprep.subr.mxu0 0.0
        %615 = vmatpush2.msra.mxu0 0.0
        %616 = vmatprep.subr.mxu0 0.0
        %617 = vmatpush2.msra.mxu0 0.0
        %618 = vmatprep.subr.mxu0 0.0
        %619 = vmatpush2.msra.mxu0 0.0
        %620 = vmatprep.subr.mxu0 0.0
        %621 = vmatpush2.msra.mxu0 0.0
        %622 = vmatprep.subr.mxu0 0.0
        %623 = vmatpush2.msra.mxu0 0.0
        %624 = vmatprep.subr.mxu0 0.0
        %625 = vmatpush2.msra.mxu0 0.0
        %626 = vmatprep.subr.mxu0 0.0
        %627 = vmatpush2.msra.mxu0 0.0
        %628 = vmatprep.subr.mxu0 0.0
        %629 = vmatpush2.msra.mxu0 0.0
        %630 = vmatprep.subr.mxu0 0.0
        %631 = vmatpush2.msra.mxu0 0.0
        %632 = vmatprep.mubr.f32.mxu0 0.0
        %633 = vmatmul.mubr.f32.gmra.mxu0 %v564
        %v634 = vpop.f32.mrf.mxu0
        %v635 = vadd.f32 %v561, %v634
        %v636 = vpop.f32.mrf.mxu0
        %637 = vdwg.mxu0
        %vm638 = vcmp.ge.f32.partialorder %v635, 0.0
        %v639 = vmul.f32 %v635, 0.01
        %v640 = vsel %vm638, %v635, %v639
        %vm657 = vcmask 1042432
        %v658 = vrot.slane %v543, 5
        %v659 = vrot.slane %v544, 5
        %v660 = vsel %vm657, %v658, %v659
        %v661 = vrot.slane %v545, 5
        %v662 = vsel %vm657, %v659, %v661
        %v663 = vrot.slane %v546, 5
        %v664 = vsel %vm657, %v661, %v663
        %v665 = vrot.slane %v547, 5
        %v666 = vsel %vm657, %v663, %v665
        %v667 = vrot.slane %v548, 5
        %v668 = vsel %vm657, %v665, %v667
        %v669 = vrot.slane %v549, 5
        %v670 = vsel %vm657, %v667, %v669
        %v671 = vrot.slane %v550, 5
        %v672 = vsel %vm657, %v669, %v671
        %v673 = vrot.slane %v551, 5
        %v674 = vsel %vm657, %v671, %v673
        %v675 = vrot.slane %v552, 5
        %v676 = vsel %vm657, %v673, %v675
        %v677 = vrot.slane %v553, 5
        %v678 = vsel %vm657, %v675, %v677
        %v679 = vrot.slane %v554, 5
        %v680 = vsel %vm657, %v677, %v679
        %v681 = vrot.slane %v555, 5
        %v682 = vsel %vm657, %v679, %v681
        %v683 = vrot.slane %v556, 5
        %v684 = vsel %vm657, %v681, %v683
        %v685 = vrot.slane %v557, 5
        %v686 = vsel %vm657, %v683, %v685
        %v687 = vrot.slane %v558, 5
        %v688 = vsel %vm657, %v685, %v687
        %v689 = vrot.slane %v559, 5
        %v690 = vsel %vm657, %v687, %v689
        %708 = vmatprep.subr.mxu0 0.0
        %709 = vmatpush1.msra.mxu0 %v690
        %710 = vmatprep.subr.mxu0 0.0
        %711 = vmatpush1.msra.mxu0 %v688
        %712 = vmatprep.subr.mxu0 0.0
        %713 = vmatpush1.msra.mxu0 %v686
        %714 = vmatprep.subr.mxu0 0.0
        %715 = vmatpush1.msra.mxu0 %v684
        %716 = vmatprep.subr.mxu0 0.0
        %717 = vmatpush1.msra.mxu0 %v682
        %718 = vmatprep.subr.mxu0 0.0
        %719 = vmatpush1.msra.mxu0 %v680
        %720 = vmatprep.subr.mxu0 0.0
        %721 = vmatpush1.msra.mxu0 %v678
        %722 = vmatprep.subr.mxu0 0.0
        %723 = vmatpush1.msra.mxu0 %v676
        %724 = vmatprep.subr.mxu0 0.0
        %725 = vmatpush1.msra.mxu0 %v674
        %726 = vmatprep.subr.mxu0 0.0
        %727 = vmatpush1.msra.mxu0 %v672
        %728 = vmatprep.subr.mxu0 0.0
        %729 = vmatpush1.msra.mxu0 %v670
        %730 = vmatprep.subr.mxu0 0.0
        %731 = vmatpush1.msra.mxu0 %v668
        %732 = vmatprep.subr.mxu0 0.0
        %733 = vmatpush1.msra.mxu0 %v666
        %734 = vmatprep.subr.mxu0 0.0
        %735 = vmatpush1.msra.mxu0 %v664
        %736 = vmatprep.subr.mxu0 0.0
        %737 = vmatpush1.msra.mxu0 %v662
        %738 = vmatprep.subr.mxu0 0.0
        %739 = vmatpush1.msra.mxu0 %v660
        %740 = vmatprep.subr.mxu0 0.0
        %741 = vmatpush2.msra.mxu0 0.0
        %742 = vmatprep.subr.mxu0 0.0
        %743 = vmatpush2.msra.mxu0 0.0
        %744 = vmatprep.subr.mxu0 0.0
        %745 = vmatpush2.msra.mxu0 0.0
        %746 = vmatprep.subr.mxu0 0.0
        %747 = vmatpush2.msra.mxu0 0.0
        %748 = vmatprep.subr.mxu0 0.0
        %749 = vmatpush2.msra.mxu0 0.0
        %750 = vmatprep.subr.mxu0 0.0
        %751 = vmatpush2.msra.mxu0 0.0
        %752 = vmatprep.subr.mxu0 0.0
        %753 = vmatpush2.msra.mxu0 0.0
        %754 = vmatprep.subr.mxu0 0.0
        %755 = vmatpush2.msra.mxu0 0.0
        %756 = vmatprep.subr.mxu0 0.0
        %757 = vmatpush2.msra.mxu0 0.0
        %758 = vmatprep.subr.mxu0 0.0
        %759 = vmatpush2.msra.mxu0 0.0
        %760 = vmatprep.subr.mxu0 0.0
        %761 = vmatpush2.msra.mxu0 0.0
        %762 = vmatprep.subr.mxu0 0.0
        %763 = vmatpush2.msra.mxu0 0.0
        %764 = vmatprep.subr.mxu0 0.0
        %765 = vmatpush2.msra.mxu0 0.0
        %766 = vmatprep.subr.mxu0 0.0
        %767 = vmatpush2.msra.mxu0 0.0
        %768 = vmatprep.subr.mxu0 0.0
        %769 = vmatpush2.msra.mxu0 0.0
        %770 = vmatprep.subr.mxu0 0.0
        %771 = vmatpush2.msra.mxu0 0.0
        %772 = vmatprep.mubr.f32.mxu0 0.0
        %773 = vmatmul.mubr.f32.gmra.mxu0 %v640
        %v774 = vpop.f32.mrf.mxu0
        %v775 = vadd.f32 %v689, %v774
        %v776 = vpop.f32.mrf.mxu0
        %777 = vdwg.mxu0
        %778 = vst [vmem:[%s202] sm:$0x1] %v775
        %s779 = sand.u32 %s116, 1
        %s780 = scalar_lea.sflag [#allocation4], %s779
        %s781 = sand.u32 %s116, 1
        %s782 = scalar_lea.vmem [#allocation5], %s781
        // Predicated region
        $region41: #{gat_forward.1} parent=35 // pred_check
          %p783 = pneg %p126
        $region42: #{gat_forward.1} parent=35 // pred_check_branch
          %785 = sbr.rel (%p783) target = $region44
        $region43: #{gat_forward.1} parent=35 // pred_region
          %s787 = ssub.s32 16, 16
          %788 = vsyncadd %s780, %s787
          %s789 = smul.addr %s19, 16
          %s790 = scalar_lea.hbm %s4, %s789
          %s792 = sshll.u32 %s782, 4
          %s793 = int_to_ptr.vmem [resolvable:$true] %s792
          %795 = dma.vmem_to_hbm [thread:$0]  %s793, 16, %s790, %s780
        $region44: #{gat_forward.1} parent=35 // pred_fallthru
          _
      $region36: #{gat_forward.1} parent=5 // pred_fallthru
        _
      %p796 = scmp.le.s32.totalorder 2, %s14
      // Predicated region
      $region45: #{gat_forward.1} parent=5 // pred_check
        %p797 = pneg %p796
      $region46: #{gat_forward.1} parent=5 // pred_check_branch
        %799 = sbr.rel (%p797) target = $region48
      $region47: #{gat_forward.1} parent=5 // pred_region
        %s800 = ssub.s32 %s14, 2
        // Predicated region
        $region49: #{gat_forward.1} parent=47 // pred_check
          %p801 = pneg %p132
        $region50: #{gat_forward.1} parent=47 // pred_check_branch
          %803 = sbr.rel (%p801) target = $region52
        $region51: #{gat_forward.1} parent=47 // pred_region
          %s804 = sand.u32 %s117, 1
          %s805 = scalar_lea.sflag [#allocation4], %s804
          %s806 = sand.u32 %s117, 1
          %s807 = scalar_lea.vmem [#allocation5], %s806
          %808 = dma.done %s805, 16
        $region52: #{gat_forward.1} parent=47 // pred_fallthru
          _
      $region48: #{gat_forward.1} parent=5 // pred_fallthru
        _
    $region6: #{gat_forward.1} parent=1 // loop_footer
      %s18 = sadd.s32 1, %s14
    $region7: #{gat_forward.1} parent=1 // loop_footer_branch
      %13 = sbr.rel target = $region3
    $region8: #{gat_forward.1} parent=1 // loop_exit
      _
    %809 = vsyncpa [#allocation3], 1
    %s810 = scalar_lea.sflag [#allocation3], 1
    %811 = vsyncpa %s810, 1
    %812 = vsyncpa [#allocation4], 1
    %s813 = scalar_lea.sflag [#allocation4], 1
    %814 = vsyncpa %s813, 1

</llo_original>
